<compile_context>
chip_gen: v6e
topology: v6e:2x2x1
jax: 0.10.0
libtpu: 0.0.40
codegen_flags: <defaults>
</compile_context>

<pallas_src>
import functools

import jax
import jax.numpy as jnp
from jax.experimental import pallas as pl
from jax.experimental.pallas import tpu as pltpu

STEP_EPOCH = 20


def _gumbel_ce_kernel(x_ref, tgt_ref, partial_ref, *, use_gumbel, n_total, tile_n):
    i = pl.program_id(0)

    x = x_ref[...].astype(jnp.float32)                        # (tile_n, C) f32

    if use_gumbel:                                            # trace-time branch
        pred = jnp.clip(x, -4.0, 10.0)
        logits = jnp.exp(-jnp.exp(-pred))                     # pestim in (0, 1]
        m = jnp.float32(1.0)                                  # constant shift: skip per-row max (XLU)
        z = logits - 1.0
    else:
        logits = x
        m = jnp.max(logits, axis=-1, keepdims=True)           # (tile_n, 1)
        z = logits - m

    # Stable log-sum-exp over the class (lane) axis.
    lse = jnp.log(jnp.sum(jnp.exp(z), axis=-1, keepdims=True))  # (tile_n, 1)

    # Gather logits[row, target[row]] with an iota mask (no materialized one-hot,
    # no materialized logp):  nll = m + lse - logits[target].
    cls = jax.lax.broadcasted_iota(jnp.int32, logits.shape, 1)
    tgt = tgt_ref[...]                                         # (tile_n, 1) int32
    x_t = jnp.sum(jnp.where(cls == tgt, logits, 0.0),
                  axis=-1, keepdims=True)                      # (tile_n, 1)

    nll = (m + lse) - x_t                                      # (tile_n, 1)

    if n_total % tile_n != 0:
        # Ragged last tile: pad rows contain garbage; mask them before the
        # partial sum so they never reach the accumulation.
        row = jax.lax.broadcasted_iota(jnp.int32, nll.shape, 0) + i * tile_n
        nll = jnp.where(row < n_total, nll, 0.0)

    partial_ref[...] = jnp.sum(nll, axis=0, keepdims=True)     # (1, 1) per-tile partial


def _round_up(v, m):
    return ((v + m - 1) // m) * m


def _vmem_limit_bytes():
    """Scoped-VMEM limit gated on the physical VMEM of the local chip."""
    try:
        cap = int(pltpu.get_tpu_info().vmem_capacity_bytes)
    except Exception:
        cap = 64 << 20                      # conservative (v7x-sized) fallback
    if cap >= (128 << 20):
        return 96 << 20                     # v5e / v6e: 128 MiB physical
    return 48 << 20                         # v7x: 64 MiB physical


def _choose_tile_n(n, c, in_dtype, vmem_limit):
    """Largest batch-tile whose full per-step VMEM footprint fits the limit.

    Accounts for lane padding (C -> round_up(C,128)), the in-kernel f32 upcast
    (~4 live f32 block intermediates), the lane-padded (tile,1) int32 target
    block, and double buffering of both inputs.
    """
    c_pad = _round_up(c, 128)
    in_bytes = jnp.dtype(in_dtype).itemsize
    per_row = (2 * c_pad * in_bytes          # logits input block, 2 buffers
               + 2 * 128 * 4                 # int32 target column, lane-padded, 2 buffers
               + 4 * c_pad * 4)              # f32 working set inside the kernel
    budget = max(vmem_limit - (8 << 20), 8 << 20)   # headroom for compiler scratch
    rows = max(8, budget // per_row)
    if rows >= n:
        return n                             # whole batch: block == full array dims
    return max(8, (rows // 8) * 8)           # sublane (8) alignment for partial blocks


def gumbel_ce(inputs, target, epoch, split=None, weight=None, tile_n=None):
    """JAX/Pallas equivalent of GumbelCE.forward(input, target, epoch, split)."""
    del split
    del weight  # TODO(synk): per-class `weight` support (module default is None).

    n, c = inputs.shape
    use_gumbel = int(epoch["epoch"]) >= STEP_EPOCH   # trace-time specialization

    vmem_limit = _vmem_limit_bytes()
    if tile_n is None:
        tile_n = _choose_tile_n(n, c, inputs.dtype, vmem_limit)
    tile_n = min(int(tile_n), n)
    grid_n = pl.cdiv(n, tile_n)

    tgt2d = target.astype(jnp.int32).reshape(n, 1)   # tiny (n, 1) index column

    kernel = functools.partial(
        _gumbel_ce_kernel, use_gumbel=use_gumbel, n_total=n, tile_n=tile_n)

    partials = pl.pallas_call(
        kernel,
        out_shape=jax.ShapeDtypeStruct((grid_n, 1), jnp.float32),
        grid=(grid_n,),
        in_specs=[
            pl.BlockSpec((tile_n, c), lambda i: (i, 0)),   # logits tile (native dtype)
            pl.BlockSpec((tile_n, 1), lambda i: (i, 0)),   # target-index column tile
        ],
        out_specs=pl.BlockSpec((1, 1), lambda i: (i, 0)),  # one partial per tile
        compiler_params=pltpu.CompilerParams(
            dimension_semantics=("parallel",),             # shard tiles across TCs (v7x)
            vmem_limit_bytes=vmem_limit,
        ),
    )(inputs, tgt2d)

    # Final reduction / mean / clamp in the wrapper (cheap: grid_n scalars).
    loss = jnp.sum(partials) * (1.0 / float(n))
    if use_gumbel:
        loss = jnp.clip(loss, 0.0, 20.0)
    return loss


def _reference(inputs, target, epoch):
    """Pure-JAX reference of the PyTorch forward (for sanity check)."""
    def ce_mean(logits, tgt):
        logp = jax.nn.log_softmax(logits.astype(jnp.float32), axis=-1)
        nll = -jnp.take_along_axis(logp, tgt[:, None], axis=-1)[:, 0]
        return jnp.mean(nll)

    if epoch["epoch"] < STEP_EPOCH:
        return ce_mean(inputs, target)
    pred = jnp.clip(inputs.astype(jnp.float32), -4.0, 10.0)
    pestim = 1.0 / jnp.exp(jnp.exp(-pred))
    return jnp.clip(ce_mean(pestim, target), 0.0, 20.0)


if __name__ == "__main__":
    key = jax.random.PRNGKey(0)
    k1, k2, k3, k4 = jax.random.split(key, 4)

    # Case 1: small batch, single tile (auto tile size), f32.
    n1, c1 = 8, 32
    logits1 = jax.random.normal(k1, (n1, c1), dtype=jnp.float32) * 3.0
    target1 = jax.random.randint(k2, (n1,), 0, c1, dtype=jnp.int32)

    # Case 2: multi-tile with a ragged last tile (forced tile_n=16, N=40) to
    # exercise batch tiling, per-tile partials and pad-row masking.
    n2, c2 = 40, 128
    logits2 = jax.random.normal(k3, (n2, c2), dtype=jnp.float32) * 3.0
    target2 = jax.random.randint(k4, (n2,), 0, c2, dtype=jnp.int32)

    # Case 3: bf16 inputs (in-kernel f32 upcast path), auto tile size.
    logits3 = (jax.random.normal(k3, (n2, c2), dtype=jnp.float32) * 3.0
               ).astype(jnp.bfloat16)
    target3 = target2

    cases = (
        (logits1, target1, None),
        (logits2, target2, 16),
        (logits3, target3, None),
    )
    for logits, target, tile in cases:
        for ep in (5, 25):                                   # both epoch branches
            epoch = {"epoch": ep}
            loss = gumbel_ce(logits, target, epoch, split="train", tile_n=tile)
            loss = jax.block_until_ready(loss)
            ref = _reference(logits, target, epoch)
            assert jnp.allclose(loss, ref, atol=1e-4, rtol=1e-4), (
                ep, tile, str(logits.dtype), float(loss), float(ref))

    print("KERNEL_OK")
</pallas_src>

<mosaic_0001>
module attributes {stable_mosaic.version = 11 : i64} {
  func.func @_gumbel_ce_kernel(%arg0: i32, %arg1: memref<8x32xf32, #tpu.memory_space<vmem>>, %arg2: memref<8x1xi32, #tpu.memory_space<vmem>>, %arg3: memref<1x1xf32, #tpu.memory_space<vmem>>) attributes {dimension_semantics = [#tpu.dimension_semantics<parallel>], iteration_bounds = array<i64: 1>, scalar_prefetch = 0 : i64, scratch_operands = 0 : i64, tpu.core_type = #tpu.core_type<tc>, window_params = [{transform_indices = @transform_0, window_bounds = array<i64: 8, 32>}, {transform_indices = @transform_1, window_bounds = array<i64: 8, 1>}, {transform_indices = @transform_2, window_bounds = array<i64: 1, 1>}]} {
    %c0 = arith.constant 0 : index
    %c0_0 = arith.constant 0 : index
    %0 = vector.load %arg1[%c0, %c0_0] : memref<8x32xf32, #tpu.memory_space<vmem>>, vector<8x32xf32>
    %cst = arith.constant dense<0xFF800000> : vector<8xf32>
    %1 = vector.multi_reduction <maximumf>, %0, %cst [1] : vector<8x32xf32> to vector<8xf32>
    %2 = vector.shape_cast %1 : vector<8xf32> to vector<8x1xf32>
    %3 = vector.broadcast %2 : vector<8x1xf32> to vector<8x32xf32>
    %4 = arith.subf %0, %3 : vector<8x32xf32>
    %5 = math.exp %4 : vector<8x32xf32>
    %cst_1 = arith.constant dense<0.000000e+00> : vector<8xf32>
    %6 = vector.multi_reduction <add>, %5, %cst_1 [1] : vector<8x32xf32> to vector<8xf32>
    %7 = vector.shape_cast %6 : vector<8xf32> to vector<8x1xf32>
    %8 = math.log %7 : vector<8x1xf32>
    %9 = tpu.iota {dimensions = array<i32: 1>} : vector<8x32xi32>
    %c0_2 = arith.constant 0 : index
    %c0_3 = arith.constant 0 : index
    %10 = vector.load %arg2[%c0_2, %c0_3] : memref<8x1xi32, #tpu.memory_space<vmem>>, vector<8x1xi32>
    %11 = vector.broadcast %10 : vector<8x1xi32> to vector<8x32xi32>
    %12 = arith.cmpi eq, %9, %11 : vector<8x32xi32>
    %cst_4 = arith.constant 0.000000e+00 : f32
    %13 = vector.broadcast %cst_4 : f32 to vector<8x32xf32>
    %14 = arith.select %12, %0, %13 : vector<8x32xi1>, vector<8x32xf32>
    %cst_5 = arith.constant dense<0.000000e+00> : vector<8xf32>
    %15 = vector.multi_reduction <add>, %14, %cst_5 [1] : vector<8x32xf32> to vector<8xf32>
    %16 = vector.shape_cast %15 : vector<8xf32> to vector<8x1xf32>
    %17 = arith.addf %2, %8 : vector<8x1xf32>
    %18 = arith.subf %17, %16 : vector<8x1xf32>
    %cst_6 = arith.constant dense<0.000000e+00> : vector<1xf32>
    %19 = vector.multi_reduction <add>, %18, %cst_6 [0] : vector<8x1xf32> to vector<1xf32>
    %20 = vector.shape_cast %19 : vector<1xf32> to vector<1x1xf32>
    %c0_7 = arith.constant 0 : index
    %c0_8 = arith.constant 0 : index
    %21 = vector.load %arg3[%c0_7, %c0_8] : memref<1x1xf32, #tpu.memory_space<vmem>>, vector<1x1xf32>
    tpu.vector_store %arg3[%c0_7, %c0_8], %20 {strides = array<i32>} : memref<1x1xf32, #tpu.memory_space<vmem>>, vector<1x1xf32>,
    return
  }
  func.func @transform_0(%arg0: i32) -> (i32, i32) {
    %c0_i32 = arith.constant 0 : i32
    %c0_i32_0 = arith.constant 0 : i32
    return %arg0, %c0_i32 : i32, i32
  }
  func.func @transform_1(%arg0: i32) -> (i32, i32) {
    %c0_i32 = arith.constant 0 : i32
    %c0_i32_0 = arith.constant 0 : i32
    return %arg0, %c0_i32 : i32, i32
  }
  func.func @transform_2(%arg0: i32) -> (i32, i32) {
    %c0_i32 = arith.constant 0 : i32
    %c0_i32_0 = arith.constant 0 : i32
    return %arg0, %c0_i32 : i32, i32
  }
}

</mosaic_0001>

<llo_original>
// kernel: tpu_custom_call.1
$region0: #{tpu_custom_call.1}
  #allocation0 [shape = 'u32[]', space=smem, size = 0x4, offset = 0x4, fixed_abs, tag = 'smem constant byte address 0x4 - core index']
  #allocation1 [shape = 'u32[144,128]{1,0:T(1,128)}', space=vmem, size = 0x12000, scoped, tag = 'internal scratch']
  %s0 = inlined_call_operand.vmem [shape: f32[8,32], index: 0, kind: input, shape index: {}]
  %s1 = inlined_call_operand.vmem [shape: s32[8,1], index: 1, kind: input, shape index: {}]
  %s2 = inlined_call_operand.hbm [shape: f32[1,1], index: 2, kind: output, shape index: {}]
  %s3 = sld [smem:[#allocation0]]
  $region18: #{tpu_custom_call.1} parent=0
    _
  %s5 = ssub.s32 1, %s3
  %s6 = scalar_select 0, %s5, %s3
  $region1: #{tpu_custom_call.1} parent=0
    #allocation2 [shape = 'u8[512]{0}', space=vmem, size = 0x400, scoped, tag = 'output window, operand 0, single buffered']
    #allocation3 [shape = 's32[1]{0}', space=sflag, size = 0x4, scoped, tag = 'scoped memory for tpu_custom_call.1']
    %7 = vsyncpa [#allocation3], 0
    // Predicated region
    $region2: #{tpu_custom_call.1} parent=1 // pred_check
      _
    $region3: #{tpu_custom_call.1} parent=1 // pred_check_branch
      %9 = sbr.rel (0) target = $region5
    $region4: #{tpu_custom_call.1} parent=1 // pred_region
      _
    $region5: #{tpu_custom_call.1} parent=1 // pred_fallthru
      _
    // Predicated region
    $region6: #{tpu_custom_call.1} parent=1 // pred_check
      _
    $region7: #{tpu_custom_call.1} parent=1 // pred_check_branch
      %11 = sbr.rel (0) target = $region9
    $region8: #{tpu_custom_call.1} parent=1 // pred_region
      _
    $region9: #{tpu_custom_call.1} parent=1 // pred_fallthru
      _
    %v12 = vld [vmem:[%s0] sm:$0xff]
    %vm13 = vcmask 261120
    %v14 = vsel %vm13, %v12, -inf
    %15 = vmax.xlane.f32.xlu0 %v14
    %v16 = vpop.xlane.xlu0 %15
    %v17 = vsub.f32 %v12, %v16
    %v18 = vmul.f32 %v17, 1.442695
    %v19 = vpow.pop %v18
    %v20 = vsel %vm13, %v19, 0.0
    %21 = vadd.xlane.f32.xlu0 %v20
    %v22 = vpop.xlane.xlu0 %21
    %v23 = vlog2.pop %v22
    %v24 = vmul.f32 %v23, 0.6931472
    %v25 = vlaneseq
    %v26 = vand.u32 %v25, 127
    %v27 = vld [vmem:[%s1] sm:$0xff]
    %28 = vset.pattern.permute.xlu0 0
    %29 = vperm.xlu0 %28, %v27
    %v30 = vpop.permute.xlu0 %29
    %vm31 = vcmp.eq.s32.totalorder %v26, %v30
    %v32 = vsel %vm31, %v12, 0.0
    %v33 = vsel %vm13, %v32, 0.0
    %34 = vadd.xlane.f32.xlu0 %v33
    %v35 = vpop.xlane.xlu0 %34
    %v36 = vadd.f32 %v16, %v24
    %v37 = vsub.f32 %v36, %v35
    %v38 = vrot.slane %v37, 4
    %v39 = vadd.f32 %v37, %v38
    %v40 = vrot.slane %v39, 2
    %v41 = vadd.f32 %v39, %v40
    %v42 = vrot.slane %v41, 1
    %v43 = vadd.f32 %v41, %v42
    %vm44 = vcmask 0
    %45 = vst.msk [vmem:[#allocation2] sm:$0x1] %vm44, %v43
    // Predicated region
    $region10: #{tpu_custom_call.1} parent=1 // pred_check
      _
    $region11: #{tpu_custom_call.1} parent=1 // pred_check_branch
      %47 = sbr.rel (0) target = $region13
    $region12: #{tpu_custom_call.1} parent=1 // pred_region
      %s49 = ssub.s32 16, 16
      %50 = vsyncadd [#allocation3], %s49
      %s52 = sshll.u32 [#allocation2], 4
      %s53 = int_to_ptr.vmem [resolvable:$true] %s52
      %55 = dma.vmem_to_hbm [thread:$0]  %s53, 16, %s2, [#allocation3]
    $region13: #{tpu_custom_call.1} parent=1 // pred_fallthru
      _
    // Predicated region
    $region14: #{tpu_custom_call.1} parent=1 // pred_check
      _
    $region15: #{tpu_custom_call.1} parent=1 // pred_check_branch
      %57 = sbr.rel (0) target = $region17
    $region16: #{tpu_custom_call.1} parent=1 // pred_region
      %58 = dma.done [#allocation3], 16
    $region17: #{tpu_custom_call.1} parent=1 // pred_fallthru
      _
    %59 = vsyncpa [#allocation3], 1

</llo_original>
